<compile_context>
chip_gen: v7x
topology: tpu7x:2x2x1
jax: 0.10.0
libtpu: 0.0.40
codegen_flags: <defaults>
</compile_context>

<pallas_src>
import jax
import jax.numpy as jnp
from jax import lax
from jax.experimental import pallas as pl
from jax.experimental.pallas import tpu as pltpu


CFG = dict(
    in_channels=4,
    out_channels=8,
    c_kernel_size=(3, 3),
    c_stride=1,
    p_kernel_size=(2, 2),
    p_stride=2,
)


def _elu(v):
    return jnp.where(v > 0, v, jnp.exp(jnp.minimum(v, 0.0)) - 1.0)


# ----------------------------- Pallas kernel ------------------------------- #

def _make_kernel(win, oc, inv_count):
    """Fused conv+BN+ELU+maxpool+1x1+ELU kernel over a (pass, P-tile) grid."""

    def kernel(patch_ref, w_ref, gamma_ref, beta_ref, w2_ref, b2_ref, out_ref,
               sum_sc, sumsq_sc, scale_sc, shift_sc):
        pass_idx = pl.program_id(0)          # 0 = BN stats pass, 1 = apply pass
        t = pl.program_id(1)                 # P tile

        @pl.when((pass_idx == 0) & (t == 0))
        def _init():
            sum_sc[...] = jnp.zeros_like(sum_sc)
            sumsq_sc[...] = jnp.zeros_like(sumsq_sc)

        # All WIN pool-window convolutions in ONE MXU call (bf16 in, f32 acc):
        #   [WIN*OC, K] @ [K, P_tile] -> [WIN*OC, P_tile]    (row = w*OC + oc)
        conv = jnp.dot(w_ref[...], patch_ref[...],
                       preferred_element_type=jnp.float32)

        @pl.when(pass_idx == 0)
        def _stats():
            # Per-channel sum / sum-of-squares over lanes + window slabs.
            cs = conv.sum(axis=1, keepdims=True)             # [WIN*OC, 1]
            cq = (conv * conv).sum(axis=1, keepdims=True)    # [WIN*OC, 1]
            s_acc = cs[0:oc]
            q_acc = cq[0:oc]
            for w in range(1, win):
                s_acc = s_acc + cs[w * oc:(w + 1) * oc]
                q_acc = q_acc + cq[w * oc:(w + 1) * oc]
            sum_sc[...] += s_acc
            sumsq_sc[...] += q_acc

        @pl.when((pass_idx == 0) & (t == pl.num_programs(1) - 1))
        def _finalize():
            mean = sum_sc[...] * inv_count                       # [OC, 1]
            var = sumsq_sc[...] * inv_count - mean * mean        # E[x^2]-mean^2
            scale = gamma_ref[...] * lax.rsqrt(var + 1e-5)
            scale_sc[...] = scale
            shift_sc[...] = beta_ref[...] - mean * scale

        @pl.when(pass_idx == 1)
        def _apply():
            sc = scale_sc[...]                                   # [OC, 1]
            sh = shift_sc[...]
            # BN affine per window (gamma may be negative -> affine before max),
            # MaxPool2d == max over the WIN static sublane slices.
            pooled = conv[0:oc] * sc + sh
            for w in range(1, win):
                pooled = jnp.maximum(pooled, conv[w * oc:(w + 1) * oc] * sc + sh)
            # ELU is monotone increasing: ELU(max(x)) == max(ELU(x)).
            pooled = _elu(pooled)                                # [OC, P_tile]
            # Conv2d(OC, 1, 1): VPU broadcast-mul + cross-sublane sum (skip MXU).
            y = jnp.sum(pooled * w2_ref[...], axis=0, keepdims=True) + b2_ref[...]
            out_ref[...] = _elu(y)                               # [1, P_tile]

    return kernel


# ------------------------------ JAX glue code ------------------------------ #

def init_params(key):
    oc = CFG['out_channels']
    c = CFG['in_channels']
    kh, kw = CFG['c_kernel_size']
    k1, k2, k3, k4 = jax.random.split(key, 4)
    return dict(
        w1=jax.random.normal(k1, (oc, c, kh, kw), jnp.float32) * 0.1,  # OIHW
        b1=jax.random.normal(k2, (oc,), jnp.float32) * 0.1,
        gamma=jnp.ones((oc,), jnp.float32),       # BatchNorm2d default weight
        beta=jnp.zeros((oc,), jnp.float32),       # BatchNorm2d default bias
        w2=jax.random.normal(k3, (1, oc, 1, 1), jnp.float32) * 0.1,    # OIHW
        b2=jax.random.normal(k4, (1,), jnp.float32) * 0.1,
    )


def _pick_p_tile_max():
    # Per-generation lane-tile ceiling (v7x has 64 MiB VMEM, v5e/v6e 128 MiB).
    try:
        vmem_bytes = pltpu.get_tpu_info().vmem_capacity_bytes
    except Exception:
        vmem_bytes = 64 * 1024 * 1024
    return 8192 if vmem_bytes > 96 * 1024 * 1024 else 4096


@jax.jit
def cnn_forward(x, params):
    kh, kw = CFG['c_kernel_size']
    cs = CFG['c_stride']
    pk_h, pk_w = CFG['p_kernel_size']
    ps = CFG['p_stride']
    oc = CFG['out_channels']
    c_in = CFG['in_channels']
    n, _, h, w = x.shape

    oh = (h - kh) // cs + 1
    ow = (w - kw) // cs + 1
    # Pool windows must tile the conv output exactly so the accumulator-BN
    # batch statistics (over the WIN window slabs) cover each conv output once.
    assert pk_h == ps and pk_w == ps and oh % pk_h == 0 and ow % pk_w == 0
    ph, pw = oh // pk_h, ow // pk_w
    p_total = n * ph * pw
    win = pk_h * pk_w

    # Shared per-position input patch spans all WIN window offsets + conv taps.
    r_span = cs * (pk_h - 1) + kh          # 4
    c_span = cs * (pk_w - 1) + kw          # 4
    kdim = c_in * r_span * c_span          # 64

    # Lane tiling: pad P to a multiple of 128 (or of the tile when tiled).
    p_tile_max = _pick_p_tile_max()
    p128 = ((p_total + 127) // 128) * 128
    if p128 <= p_tile_max:
        p_tile, p_pad = p128, p128
    else:
        p_tile = p_tile_max
        p_pad = ((p_total + p_tile - 1) // p_tile) * p_tile
    n_tiles = p_pad // p_tile

    # Patch tensor [C*r_span*c_span, P_pad] in bf16; P ordered (n, ph, pw):
    #   patch[c*16 + dr*4 + dc, n*ph*pw + y*pw + z] = x[n, c, 2y + dr, 2z + dc]
    xb = x.astype(jnp.bfloat16)
    rstep = cs * ps
    taps = []
    for dr in range(r_span):
        for dc in range(c_span):
            sl = xb[:, :, dr: dr + (ph - 1) * rstep + 1: rstep,
                          dc: dc + (pw - 1) * rstep + 1: rstep]   # [N,C,PH,PW]
            taps.append(sl)
    patch = jnp.stack(taps, axis=0)                  # [r*c, N, C, PH, PW]
    patch = jnp.transpose(patch, (2, 0, 1, 3, 4))    # [C, r*c, N, PH, PW]
    patch = patch.reshape(kdim, p_total)
    patch = jnp.pad(patch, ((0, 0), (0, p_pad - p_total)))        # zero lanes

    # Zero-scattered conv weights: one MXU call gives all WIN window convs.
    #   w_all[w*OC + o, c*16 + (cs*i+dh)*4 + (cs*j+dw)] = w1[o, c, dh, dw]
    # b1 is dropped: a bias before training-mode BN batch stats cancels exactly.
    w1 = params['w1']
    w_all = jnp.zeros((win, oc, c_in, r_span, c_span), jnp.float32)
    for i in range(pk_h):
        for j in range(pk_w):
            w_all = w_all.at[i * pk_w + j, :, :,
                             cs * i: cs * i + kh, cs * j: cs * j + kw].set(w1)
    w_all = w_all.reshape(win * oc, kdim).astype(jnp.bfloat16)

    gamma = params['gamma'].reshape(oc, 1)
    beta = params['beta'].reshape(oc, 1)
    w2 = params['w2'].reshape(1, oc).T               # [OC, 1]
    b2 = params['b2'].reshape(1, 1)

    # True conv-output count per channel (padded lanes contribute exact zeros).
    inv_count = 1.0 / float(win * p_total)           # == N*OH*OW
    kernel = _make_kernel(win, oc, inv_count)

    cost = pl.CostEstimate(
        flops=2 * 2 * (win * oc) * kdim * p_pad + 12 * win * oc * p_pad,
        transcendentals=(oc + 1) * p_pad,
        bytes_accessed=2 * patch.size * 2 + p_pad * 4 + win * oc * kdim * 2,
    )

    out = pl.pallas_call(
        kernel,
        out_shape=jax.ShapeDtypeStruct((1, p_pad), jnp.float32),
        grid_spec=pltpu.PrefetchScalarGridSpec(
            num_scalar_prefetch=0,
            grid=(2, n_tiles),                       # (BN pass, P tile)
            in_specs=[
                pl.BlockSpec((kdim, p_tile), lambda s_, t: (0, t)),   # patch
                pl.BlockSpec((win * oc, kdim), lambda s_, t: (0, 0)),  # w_all
                pl.BlockSpec((oc, 1), lambda s_, t: (0, 0)),           # gamma
                pl.BlockSpec((oc, 1), lambda s_, t: (0, 0)),           # beta
                pl.BlockSpec((oc, 1), lambda s_, t: (0, 0)),           # w2
                pl.BlockSpec((1, 1), lambda s_, t: (0, 0)),            # b2
            ],
            # During the stats pass (s_=0) the output window parks on tile 0 so
            # no never-written buffers get flushed; pass 1 writes every tile.
            out_specs=pl.BlockSpec((1, p_tile), lambda s_, t: (0, s_ * t)),
            scratch_shapes=[pltpu.VMEM((oc, 1), jnp.float32)] * 4,
        ),
        compiler_params=pltpu.CompilerParams(
            # Both axes are sequential reductions into scratch.
            # TODO(synk): per-core partial sums would let the apply pass run
            # "parallel" across v7x's two TensorCores.
            dimension_semantics=("arbitrary", "arbitrary"),
            vmem_limit_bytes=32 * 1024 * 1024,
        ),
        cost_estimate=cost,
    )(patch, w_all, gamma, beta, w2, b2)             # [1, P_pad]

    return out[0, :p_total].reshape(n, 1, ph, pw)    # NCHW [N, 1, PH, PW]


def cnn_reference(x, params):
    """Pure-JAX reference replicating the PyTorch forward (training-mode BN)."""
    s = CFG['c_stride']
    dn = ('NCHW', 'OIHW', 'NCHW')
    conv = lax.conv_general_dilated(x, params['w1'], (s, s), 'VALID',
                                    dimension_numbers=dn)
    conv = conv + params['b1'][None, :, None, None]
    mean = jnp.mean(conv, axis=(0, 2, 3), keepdims=True)
    var = jnp.mean((conv - mean) ** 2, axis=(0, 2, 3), keepdims=True)
    bn = (conv - mean) / jnp.sqrt(var + 1e-5)
    bn = bn * params['gamma'][None, :, None, None] + params['beta'][None, :, None, None]
    act = _elu(bn)
    pk_h, pk_w = CFG['p_kernel_size']
    ps = CFG['p_stride']
    pooled = lax.reduce_window(act, -jnp.inf, lax.max,
                               (1, 1, pk_h, pk_w), (1, 1, ps, ps), 'VALID')
    y = lax.conv_general_dilated(pooled, params['w2'], (1, 1), 'VALID',
                                 dimension_numbers=dn)
    y = y + params['b2'][None, :, None, None]
    return _elu(y)


if __name__ == "__main__":
    key = jax.random.PRNGKey(0)
    kx, kp = jax.random.split(key)
    x = jax.random.normal(kx, (2, CFG['in_channels'], 16, 16), jnp.float32)
    params = init_params(kp)

    out = jax.block_until_ready(cnn_forward(x, params))
    ref = jax.block_until_ready(cnn_reference(x, params))
    assert out.shape == ref.shape, (out.shape, ref.shape)
    err = float(jnp.max(jnp.abs(out - ref)))
    # bf16 MXU operands (f32 accumulation + f32 reference) -> ~1e-3 deviation.
    assert jnp.allclose(out, ref, atol=1e-2, rtol=1e-2), err
    print("KERNEL_OK")
</pallas_src>

<mosaic_0001>
module attributes {stable_mosaic.version = 11 : i64} {
  func.func @kernel(%arg0: i32, %arg1: i32, %arg2: memref<64x128xbf16, #tpu.memory_space<vmem>>, %arg3: memref<32x64xbf16, #tpu.memory_space<vmem>>, %arg4: memref<8x1xf32, #tpu.memory_space<vmem>>, %arg5: memref<8x1xf32, #tpu.memory_space<vmem>>, %arg6: memref<8x1xf32, #tpu.memory_space<vmem>>, %arg7: memref<1x1xf32, #tpu.memory_space<vmem>>, %arg8: memref<1x128xf32, #tpu.memory_space<vmem>>, %arg9: memref<8x1xf32, #tpu.memory_space<vmem>>, %arg10: memref<8x1xf32, #tpu.memory_space<vmem>>, %arg11: memref<8x1xf32, #tpu.memory_space<vmem>>, %arg12: memref<8x1xf32, #tpu.memory_space<vmem>>) attributes {dimension_semantics = [#tpu.dimension_semantics<arbitrary>, #tpu.dimension_semantics<arbitrary>], iteration_bounds = array<i64: 2, 1>, scalar_prefetch = 0 : i64, scratch_operands = 4 : i64, tpu.core_type = #tpu.core_type<tc>, window_params = [{transform_indices = @transform_0, window_bounds = array<i64: 64, 128>}, {pipeline_mode = #tpu.pipeline_mode<synchronous>, transform_indices = @transform_1, window_bounds = array<i64: 32, 64>}, {pipeline_mode = #tpu.pipeline_mode<synchronous>, transform_indices = @transform_2, window_bounds = array<i64: 8, 1>}, {pipeline_mode = #tpu.pipeline_mode<synchronous>, transform_indices = @transform_3, window_bounds = array<i64: 8, 1>}, {pipeline_mode = #tpu.pipeline_mode<synchronous>, transform_indices = @transform_4, window_bounds = array<i64: 8, 1>}, {pipeline_mode = #tpu.pipeline_mode<synchronous>, transform_indices = @transform_5, window_bounds = array<i64: 1, 1>}, {transform_indices = @transform_6, window_bounds = array<i64: 1, 128>}]} {
    %c0_i32 = arith.constant 0 : i32
    %0 = arith.cmpi eq, %arg0, %c0_i32 : i32
    %c0_i32_0 = arith.constant 0 : i32
    %1 = arith.cmpi eq, %arg1, %c0_i32_0 : i32
    %2 = arith.andi %0, %1 : i1
    %3 = arith.extui %2 : i1 to i32
    %c0_i32_1 = arith.constant 0 : i32
    %4 = arith.cmpi ne, %3, %c0_i32_1 : i32
    scf.if %4 {
      %cst_11 = arith.constant 0.000000e+00 : f32
      %19 = vector.broadcast %cst_11 : f32 to vector<8x1xf32>
      %c0_12 = arith.constant 0 : index
      %c0_13 = arith.constant 0 : index
      %20 = vector.load %arg9[%c0_12, %c0_13] : memref<8x1xf32, #tpu.memory_space<vmem>>, vector<8x1xf32>
      tpu.vector_store %arg9[%c0_12, %c0_13], %19 {strides = array<i32>} : memref<8x1xf32, #tpu.memory_space<vmem>>, vector<8x1xf32>,
      %cst_14 = arith.constant 0.000000e+00 : f32
      %21 = vector.broadcast %cst_14 : f32 to vector<8x1xf32>
      %c0_15 = arith.constant 0 : index
      %c0_16 = arith.constant 0 : index
      %22 = vector.load %arg10[%c0_15, %c0_16] : memref<8x1xf32, #tpu.memory_space<vmem>>, vector<8x1xf32>
      tpu.vector_store %arg10[%c0_15, %c0_16], %21 {strides = array<i32>} : memref<8x1xf32, #tpu.memory_space<vmem>>, vector<8x1xf32>,
    } else {
    }
    %c0 = arith.constant 0 : index
    %c0_2 = arith.constant 0 : index
    %5 = vector.load %arg3[%c0, %c0_2] : memref<32x64xbf16, #tpu.memory_space<vmem>>, vector<32x64xbf16>
    %c0_3 = arith.constant 0 : index
    %c0_4 = arith.constant 0 : index
    %6 = vector.load %arg2[%c0_3, %c0_4] : memref<64x128xbf16, #tpu.memory_space<vmem>>, vector<64x128xbf16>
    %cst = arith.constant dense<0.000000e+00> : vector<32x128xf32>
    %7 = tpu.matmul %5, %6, %cst {dimension_numbers = #tpu.dot_dimension_numbers<[1], [0], [0], [1], [0, 0, 1, 1], [], []>} : vector<32x64xbf16>, vector<64x128xbf16>, vector<32x128xf32> -> vector<32x128xf32>
    %c0_i32_5 = arith.constant 0 : i32
    %8 = arith.cmpi eq, %arg0, %c0_i32_5 : i32
    %9 = arith.extui %8 : i1 to i32
    %c0_i32_6 = arith.constant 0 : i32
    %10 = arith.cmpi ne, %9, %c0_i32_6 : i32
    scf.if %10 {
      %cst_11 = arith.constant dense<0.000000e+00> : vector<32xf32>
      %19 = vector.multi_reduction <add>, %7, %cst_11 [1] : vector<32x128xf32> to vector<32xf32>
      %20 = vector.shape_cast %19 : vector<32xf32> to vector<32x1xf32>
      %21 = arith.mulf %7, %7 : vector<32x128xf32>
      %cst_12 = arith.constant dense<0.000000e+00> : vector<32xf32>
      %22 = vector.multi_reduction <add>, %21, %cst_12 [1] : vector<32x128xf32> to vector<32xf32>
      %23 = vector.shape_cast %22 : vector<32xf32> to vector<32x1xf32>
      %24 = vector.extract_strided_slice %20 {offsets = [0, 0], sizes = [8, 1], strides = [1, 1]} : vector<32x1xf32> to vector<8x1xf32>
      %25 = vector.extract_strided_slice %23 {offsets = [0, 0], sizes = [8, 1], strides = [1, 1]} : vector<32x1xf32> to vector<8x1xf32>
      %26 = vector.extract_strided_slice %20 {offsets = [8, 0], sizes = [8, 1], strides = [1, 1]} : vector<32x1xf32> to vector<8x1xf32>
      %27 = arith.addf %24, %26 : vector<8x1xf32>
      %28 = vector.extract_strided_slice %23 {offsets = [8, 0], sizes = [8, 1], strides = [1, 1]} : vector<32x1xf32> to vector<8x1xf32>
      %29 = arith.addf %25, %28 : vector<8x1xf32>
      %30 = vector.extract_strided_slice %20 {offsets = [16, 0], sizes = [8, 1], strides = [1, 1]} : vector<32x1xf32> to vector<8x1xf32>
      %31 = arith.addf %27, %30 : vector<8x1xf32>
      %32 = vector.extract_strided_slice %23 {offsets = [16, 0], sizes = [8, 1], strides = [1, 1]} : vector<32x1xf32> to vector<8x1xf32>
      %33 = arith.addf %29, %32 : vector<8x1xf32>
      %34 = vector.extract_strided_slice %20 {offsets = [24, 0], sizes = [8, 1], strides = [1, 1]} : vector<32x1xf32> to vector<8x1xf32>
      %35 = arith.addf %31, %34 : vector<8x1xf32>
      %36 = vector.extract_strided_slice %23 {offsets = [24, 0], sizes = [8, 1], strides = [1, 1]} : vector<32x1xf32> to vector<8x1xf32>
      %37 = arith.addf %33, %36 : vector<8x1xf32>
      %c0_13 = arith.constant 0 : index
      %c0_14 = arith.constant 0 : index
      %38 = vector.load %arg9[%c0_13, %c0_14] : memref<8x1xf32, #tpu.memory_space<vmem>>, vector<8x1xf32>
      %39 = arith.addf %38, %35 : vector<8x1xf32>
      %c0_15 = arith.constant 0 : index
      %c0_16 = arith.constant 0 : index
      %40 = vector.load %arg9[%c0_15, %c0_16] : memref<8x1xf32, #tpu.memory_space<vmem>>, vector<8x1xf32>
      tpu.vector_store %arg9[%c0_15, %c0_16], %39 {strides = array<i32>} : memref<8x1xf32, #tpu.memory_space<vmem>>, vector<8x1xf32>,
      %c0_17 = arith.constant 0 : index
      %c0_18 = arith.constant 0 : index
      %41 = vector.load %arg10[%c0_17, %c0_18] : memref<8x1xf32, #tpu.memory_space<vmem>>, vector<8x1xf32>
      %42 = arith.addf %41, %37 : vector<8x1xf32>
      %c0_19 = arith.constant 0 : index
      %c0_20 = arith.constant 0 : index
      %43 = vector.load %arg10[%c0_19, %c0_20] : memref<8x1xf32, #tpu.memory_space<vmem>>, vector<8x1xf32>
      tpu.vector_store %arg10[%c0_19, %c0_20], %42 {strides = array<i32>} : memref<8x1xf32, #tpu.memory_space<vmem>>, vector<8x1xf32>,
    } else {
    }
    %c0_i32_7 = arith.constant 0 : i32
    %11 = arith.cmpi eq, %arg0, %c0_i32_7 : i32
    %c0_i32_8 = arith.constant 0 : i32
    %12 = arith.cmpi eq, %arg1, %c0_i32_8 : i32
    %13 = arith.andi %11, %12 : i1
    %14 = arith.extui %13 : i1 to i32
    %c0_i32_9 = arith.constant 0 : i32
    %15 = arith.cmpi ne, %14, %c0_i32_9 : i32
    scf.if %15 {
      %c0_11 = arith.constant 0 : index
      %c0_12 = arith.constant 0 : index
      %19 = vector.load %arg9[%c0_11, %c0_12] : memref<8x1xf32, #tpu.memory_space<vmem>>, vector<8x1xf32>
      %cst_13 = arith.constant 0.00255102036 : f32
      %20 = vector.broadcast %cst_13 : f32 to vector<8x1xf32>
      %21 = arith.mulf %19, %20 : vector<8x1xf32>
      %c0_14 = arith.constant 0 : index
      %c0_15 = arith.constant 0 : index
      %22 = vector.load %arg10[%c0_14, %c0_15] : memref<8x1xf32, #tpu.memory_space<vmem>>, vector<8x1xf32>
      %cst_16 = arith.constant 0.00255102036 : f32
      %23 = vector.broadcast %cst_16 : f32 to vector<8x1xf32>
      %24 = arith.mulf %22, %23 : vector<8x1xf32>
      %25 = arith.mulf %21, %21 : vector<8x1xf32>
      %26 = arith.subf %24, %25 : vector<8x1xf32>
      %c0_17 = arith.constant 0 : index
      %c0_18 = arith.constant 0 : index
      %27 = vector.load %arg4[%c0_17, %c0_18] : memref<8x1xf32, #tpu.memory_space<vmem>>, vector<8x1xf32>
      %cst_19 = arith.constant 9.99999974E-6 : f32
      %28 = vector.broadcast %cst_19 : f32 to vector<8x1xf32>
      %29 = arith.addf %26, %28 : vector<8x1xf32>
      %30 = math.rsqrt %29 : vector<8x1xf32>
      %31 = arith.mulf %27, %30 : vector<8x1xf32>
      %c0_20 = arith.constant 0 : index
      %c0_21 = arith.constant 0 : index
      %32 = vector.load %arg11[%c0_20, %c0_21] : memref<8x1xf32, #tpu.memory_space<vmem>>, vector<8x1xf32>
      tpu.vector_store %arg11[%c0_20, %c0_21], %31 {strides = array<i32>} : memref<8x1xf32, #tpu.memory_space<vmem>>, vector<8x1xf32>,
      %c0_22 = arith.constant 0 : index
      %c0_23 = arith.constant 0 : index
      %33 = vector.load %arg5[%c0_22, %c0_23] : memref<8x1xf32, #tpu.memory_space<vmem>>, vector<8x1xf32>
      %34 = arith.mulf %21, %31 : vector<8x1xf32>
      %35 = arith.subf %33, %34 : vector<8x1xf32>
      %c0_24 = arith.constant 0 : index
      %c0_25 = arith.constant 0 : index
      %36 = vector.load %arg12[%c0_24, %c0_25] : memref<8x1xf32, #tpu.memory_space<vmem>>, vector<8x1xf32>
      tpu.vector_store %arg12[%c0_24, %c0_25], %35 {strides = array<i32>} : memref<8x1xf32, #tpu.memory_space<vmem>>, vector<8x1xf32>,
    } else {
    }
    %c1_i32 = arith.constant 1 : i32
    %16 = arith.cmpi eq, %arg0, %c1_i32 : i32
    %17 = arith.extui %16 : i1 to i32
    %c0_i32_10 = arith.constant 0 : i32
    %18 = arith.cmpi ne, %17, %c0_i32_10 : i32
    scf.if %18 {
      %c0_11 = arith.constant 0 : index
      %c0_12 = arith.constant 0 : index
      %19 = vector.load %arg11[%c0_11, %c0_12] : memref<8x1xf32, #tpu.memory_space<vmem>>, vector<8x1xf32>
      %c0_13 = arith.constant 0 : index
      %c0_14 = arith.constant 0 : index
      %20 = vector.load %arg12[%c0_13, %c0_14] : memref<8x1xf32, #tpu.memory_space<vmem>>, vector<8x1xf32>
      %21 = vector.extract_strided_slice %7 {offsets = [0, 0], sizes = [8, 128], strides = [1, 1]} : vector<32x128xf32> to vector<8x128xf32>
      %22 = vector.broadcast %19 : vector<8x1xf32> to vector<8x128xf32>
      %23 = arith.mulf %21, %22 : vector<8x128xf32>
      %24 = vector.broadcast %20 : vector<8x1xf32> to vector<8x128xf32>
      %25 = arith.addf %23, %24 : vector<8x128xf32>
      %26 = vector.extract_strided_slice %7 {offsets = [8, 0], sizes = [8, 128], strides = [1, 1]} : vector<32x128xf32> to vector<8x128xf32>
      %27 = vector.broadcast %19 : vector<8x1xf32> to vector<8x128xf32>
      %28 = arith.mulf %26, %27 : vector<8x128xf32>
      %29 = vector.broadcast %20 : vector<8x1xf32> to vector<8x128xf32>
      %30 = arith.addf %28, %29 : vector<8x128xf32>
      %31 = arith.maximumf %25, %30 : vector<8x128xf32>
      %32 = vector.extract_strided_slice %7 {offsets = [16, 0], sizes = [8, 128], strides = [1, 1]} : vector<32x128xf32> to vector<8x128xf32>
      %33 = vector.broadcast %19 : vector<8x1xf32> to vector<8x128xf32>
      %34 = arith.mulf %32, %33 : vector<8x128xf32>
      %35 = vector.broadcast %20 : vector<8x1xf32> to vector<8x128xf32>
      %36 = arith.addf %34, %35 : vector<8x128xf32>
      %37 = arith.maximumf %31, %36 : vector<8x128xf32>
      %38 = vector.extract_strided_slice %7 {offsets = [24, 0], sizes = [8, 128], strides = [1, 1]} : vector<32x128xf32> to vector<8x128xf32>
      %39 = vector.broadcast %19 : vector<8x1xf32> to vector<8x128xf32>
      %40 = arith.mulf %38, %39 : vector<8x128xf32>
      %41 = vector.broadcast %20 : vector<8x1xf32> to vector<8x128xf32>
      %42 = arith.addf %40, %41 : vector<8x128xf32>
      %43 = arith.maximumf %37, %42 : vector<8x128xf32>
      %cst_15 = arith.constant 0.000000e+00 : f32
      %44 = vector.broadcast %cst_15 : f32 to vector<8x128xf32>
      %45 = arith.cmpf ogt, %43, %44 : vector<8x128xf32>
      %cst_16 = arith.constant 0.000000e+00 : f32
      %46 = vector.broadcast %cst_16 : f32 to vector<8x128xf32>
      %47 = arith.minimumf %43, %46 : vector<8x128xf32>
      %48 = math.exp %47 : vector<8x128xf32>
      %cst_17 = arith.constant 1.000000e+00 : f32
      %49 = vector.broadcast %cst_17 : f32 to vector<8x128xf32>
      %50 = arith.subf %48, %49 : vector<8x128xf32>
      %51 = arith.select %45, %43, %50 : vector<8x128xi1>, vector<8x128xf32>
      %c0_18 = arith.constant 0 : index
      %c0_19 = arith.constant 0 : index
      %52 = vector.load %arg6[%c0_18, %c0_19] : memref<8x1xf32, #tpu.memory_space<vmem>>, vector<8x1xf32>
      %53 = vector.broadcast %52 : vector<8x1xf32> to vector<8x128xf32>
      %54 = arith.mulf %51, %53 : vector<8x128xf32>
      %cst_20 = arith.constant dense<0.000000e+00> : vector<128xf32>
      %55 = vector.multi_reduction <add>, %54, %cst_20 [0] : vector<8x128xf32> to vector<128xf32>
      %56 = vector.shape_cast %55 : vector<128xf32> to vector<1x128xf32>
      %c0_21 = arith.constant 0 : index
      %c0_22 = arith.constant 0 : index
      %57 = vector.load %arg7[%c0_21, %c0_22] : memref<1x1xf32, #tpu.memory_space<vmem>>, vector<1x1xf32>
      %58 = vector.broadcast %57 : vector<1x1xf32> to vector<1x128xf32>
      %59 = arith.addf %56, %58 : vector<1x128xf32>
      %cst_23 = arith.constant 0.000000e+00 : f32
      %60 = vector.broadcast %cst_23 : f32 to vector<1x128xf32>
      %61 = arith.cmpf ogt, %59, %60 : vector<1x128xf32>
      %cst_24 = arith.constant 0.000000e+00 : f32
      %62 = vector.broadcast %cst_24 : f32 to vector<1x128xf32>
      %63 = arith.minimumf %59, %62 : vector<1x128xf32>
      %64 = math.exp %63 : vector<1x128xf32>
      %cst_25 = arith.constant 1.000000e+00 : f32
      %65 = vector.broadcast %cst_25 : f32 to vector<1x128xf32>
      %66 = arith.subf %64, %65 : vector<1x128xf32>
      %67 = arith.select %61, %59, %66 : vector<1x128xi1>, vector<1x128xf32>
      %c0_26 = arith.constant 0 : index
      %c0_27 = arith.constant 0 : index
      %68 = vector.load %arg8[%c0_26, %c0_27] : memref<1x128xf32, #tpu.memory_space<vmem>>, vector<1x128xf32>
      tpu.vector_store %arg8[%c0_26, %c0_27], %67 {strides = array<i32>} : memref<1x128xf32, #tpu.memory_space<vmem>>, vector<1x128xf32>,
    } else {
    }
    return
  }
  func.func @transform_0(%arg0: i32, %arg1: i32) -> (i32, i32) {
    %c0_i32 = arith.constant 0 : i32
    %c0_i32_0 = arith.constant 0 : i32
    return %c0_i32, %arg1 : i32, i32
  }
  func.func @transform_1(%arg0: i32, %arg1: i32) -> (i32, i32) {
    %c0_i32 = arith.constant 0 : i32
    %c0_i32_0 = arith.constant 0 : i32
    %c0_i32_1 = arith.constant 0 : i32
    return %c0_i32, %c0_i32_0 : i32, i32
  }
  func.func @transform_2(%arg0: i32, %arg1: i32) -> (i32, i32) {
    %c0_i32 = arith.constant 0 : i32
    %c0_i32_0 = arith.constant 0 : i32
    %c0_i32_1 = arith.constant 0 : i32
    return %c0_i32, %c0_i32_0 : i32, i32
  }
  func.func @transform_3(%arg0: i32, %arg1: i32) -> (i32, i32) {
    %c0_i32 = arith.constant 0 : i32
    %c0_i32_0 = arith.constant 0 : i32
    %c0_i32_1 = arith.constant 0 : i32
    return %c0_i32, %c0_i32_0 : i32, i32
  }
  func.func @transform_4(%arg0: i32, %arg1: i32) -> (i32, i32) {
    %c0_i32 = arith.constant 0 : i32
    %c0_i32_0 = arith.constant 0 : i32
    %c0_i32_1 = arith.constant 0 : i32
    return %c0_i32, %c0_i32_0 : i32, i32
  }
  func.func @transform_5(%arg0: i32, %arg1: i32) -> (i32, i32) {
    %c0_i32 = arith.constant 0 : i32
    %c0_i32_0 = arith.constant 0 : i32
    %c0_i32_1 = arith.constant 0 : i32
    return %c0_i32, %c0_i32_0 : i32, i32
  }
  func.func @transform_6(%arg0: i32, %arg1: i32) -> (i32, i32) {
    %0 = arith.muli %arg0, %arg1 : i32
    %c0_i32 = arith.constant 0 : i32
    %c0_i32_0 = arith.constant 0 : i32
    return %c0_i32, %0 : i32, i32
  }
}

</mosaic_0001>

<llo_original>
// kernel: squeeze.0
$region0: #{squeeze.0}
  %s0 = inlined_call_operand.vmem [shape: f32[98], index: 0, kind: input, shape index: {}]
  %s1 = inlined_call_operand.hbm [shape: f32[2,1,7,7], index: 1, kind: output, shape index: {}]
  $region1: #{squeeze.0} parent=0
    #allocation0 [shape = 'u8[7168]{0}', space=vmem, size = 0x1c00, scoped, tag = 'operand span for operand 1']
    #allocation1 [shape = 's32[1]{0}', space=sflag, size = 0x4, scoped, tag = 'scoped memory for squeeze.0']
    #allocation2 [shape = 'u8[57344]{0}', space=vmem, size = 0xe000, scoped, tag = 'scoped mem for output reshape']
    #allocation3 [shape = 'u8[4096]{0}', space=vmem, size = 0x1000, scoped, tag = 'scoped mem for input reshape']
    %2 = vsyncpa [#allocation1], 0
    %s4 = sshllo.u32 0, 1
    %v5 = vld [vmem:[%s0] sm:%s4]
    %6 = vst [vmem:[#allocation3] sm:%s4] %v5
    %v7 = vld [vmem:[#allocation3] sm:$0x1]
    %vm8 = vcmask 56320
    %9 = vst.msk [vmem:[#allocation2] sm:$0x1] %vm8, %v7
    %v10 = vld [vmem:[#allocation3] sm:$0x1]
    %11 = vrot.lane.b32.xlu0 %v10, 121
    %v12 = vpop.permute.xlu0 %11
    %vm13 = vcmask 56320
    %s14 = scalar_lea.vmem [#allocation2], 8
    %15 = vst.msk [vmem:[%s14] sm:$0x1] %vm13, %v12
    %v16 = vld [vmem:[#allocation3] sm:$0x1]
    %17 = vrot.lane.b32.xlu0 %v16, 114
    %v18 = vpop.permute.xlu0 %17
    %vm19 = vcmask 56320
    %s20 = scalar_lea.vmem [#allocation2], 16
    %21 = vst.msk [vmem:[%s20] sm:$0x1] %vm19, %v18
    %v22 = vld [vmem:[#allocation3] sm:$0x1]
    %23 = vrot.lane.b32.xlu0 %v22, 107
    %v24 = vpop.permute.xlu0 %23
    %vm25 = vcmask 56320
    %s26 = scalar_lea.vmem [#allocation2], 24
    %27 = vst.msk [vmem:[%s26] sm:$0x1] %vm25, %v24
    %v28 = vld [vmem:[#allocation3] sm:$0x1]
    %29 = vrot.lane.b32.xlu0 %v28, 100
    %v30 = vpop.permute.xlu0 %29
    %vm31 = vcmask 56320
    %s32 = scalar_lea.vmem [#allocation2], 32
    %33 = vst.msk [vmem:[%s32] sm:$0x1] %vm31, %v30
    %v34 = vld [vmem:[#allocation3] sm:$0x1]
    %35 = vrot.lane.b32.xlu0 %v34, 93
    %v36 = vpop.permute.xlu0 %35
    %vm37 = vcmask 56320
    %s38 = scalar_lea.vmem [#allocation2], 40
    %39 = vst.msk [vmem:[%s38] sm:$0x1] %vm37, %v36
    %v40 = vld [vmem:[#allocation3] sm:$0x1]
    %41 = vrot.lane.b32.xlu0 %v40, 86
    %v42 = vpop.permute.xlu0 %41
    %vm43 = vcmask 56320
    %s44 = scalar_lea.vmem [#allocation2], 48
    %45 = vst.msk [vmem:[%s44] sm:$0x1] %vm43, %v42
    %v46 = vld [vmem:[#allocation3] sm:$0x1]
    %47 = vrot.lane.b32.xlu0 %v46, 79
    %v48 = vpop.permute.xlu0 %47
    %vm49 = vcmask 56320
    %s50 = scalar_lea.vmem [#allocation2], 56
    %51 = vst.msk [vmem:[%s50] sm:$0x1] %vm49, %v48
    %v52 = vld [vmem:[#allocation3] sm:$0x1]
    %53 = vrot.lane.b32.xlu0 %v52, 72
    %v54 = vpop.permute.xlu0 %53
    %vm55 = vcmask 56320
    %s56 = scalar_lea.vmem [#allocation2], 64
    %57 = vst.msk [vmem:[%s56] sm:$0x1] %vm55, %v54
    %v58 = vld [vmem:[#allocation3] sm:$0x1]
    %59 = vrot.lane.b32.xlu0 %v58, 65
    %v60 = vpop.permute.xlu0 %59
    %vm61 = vcmask 56320
    %s62 = scalar_lea.vmem [#allocation2], 72
    %63 = vst.msk [vmem:[%s62] sm:$0x1] %vm61, %v60
    %v64 = vld [vmem:[#allocation3] sm:$0x1]
    %65 = vrot.lane.b32.xlu0 %v64, 58
    %v66 = vpop.permute.xlu0 %65
    %vm67 = vcmask 56320
    %s68 = scalar_lea.vmem [#allocation2], 80
    %69 = vst.msk [vmem:[%s68] sm:$0x1] %vm67, %v66
    %v70 = vld [vmem:[#allocation3] sm:$0x1]
    %71 = vrot.lane.b32.xlu0 %v70, 51
    %v72 = vpop.permute.xlu0 %71
    %vm73 = vcmask 56320
    %s74 = scalar_lea.vmem [#allocation2], 88
    %75 = vst.msk [vmem:[%s74] sm:$0x1] %vm73, %v72
    %v76 = vld [vmem:[#allocation3] sm:$0x1]
    %77 = vrot.lane.b32.xlu0 %v76, 44
    %v78 = vpop.permute.xlu0 %77
    %vm79 = vcmask 56320
    %s80 = scalar_lea.vmem [#allocation2], 96
    %81 = vst.msk [vmem:[%s80] sm:$0x1] %vm79, %v78
    %v82 = vld [vmem:[#allocation3] sm:$0x1]
    %83 = vrot.lane.b32.xlu0 %v82, 37
    %v84 = vpop.permute.xlu0 %83
    %vm85 = vcmask 56320
    %s86 = scalar_lea.vmem [#allocation2], 104
    %87 = vst.msk [vmem:[%s86] sm:$0x1] %vm85, %v84
    %s89 = sshllo.u32 0, 1
    %v91 = vld [vmem:[#allocation2] sm:%s89]
    %s92 = sshllo.u32 0, 1
    %93 = vst [vmem:[#allocation0] sm:%s92] %v91
    %s94 = scalar_lea.vmem [#allocation2], 8
    %v95 = vld [vmem:[%s94] sm:%s89]
    %s96 = sshllo.u32 0, 1
    %s97 = scalar_lea.vmem [#allocation0], 1
    %98 = vst [vmem:[%s97] sm:%s96] %v95
    %s99 = scalar_lea.vmem [#allocation2], 16
    %v100 = vld [vmem:[%s99] sm:%s89]
    %s101 = sshllo.u32 0, 1
    %s102 = smul.addr 1, 2
    %s103 = scalar_lea.vmem [#allocation0], %s102
    %104 = vst [vmem:[%s103] sm:%s101] %v100
    %s105 = scalar_lea.vmem [#allocation2], 24
    %v106 = vld [vmem:[%s105] sm:%s89]
    %s107 = sshllo.u32 0, 1
    %s108 = smul.addr 1, 3
    %s109 = scalar_lea.vmem [#allocation0], %s108
    %110 = vst [vmem:[%s109] sm:%s107] %v106
    %s111 = scalar_lea.vmem [#allocation2], 32
    %v112 = vld [vmem:[%s111] sm:%s89]
    %s113 = sshllo.u32 0, 1
    %s114 = smul.addr 1, 4
    %s115 = scalar_lea.vmem [#allocation0], %s114
    %116 = vst [vmem:[%s115] sm:%s113] %v112
    %s117 = scalar_lea.vmem [#allocation2], 40
    %v118 = vld [vmem:[%s117] sm:%s89]
    %s119 = sshllo.u32 0, 1
    %s120 = smul.addr 1, 5
    %s121 = scalar_lea.vmem [#allocation0], %s120
    %122 = vst [vmem:[%s121] sm:%s119] %v118
    %s123 = scalar_lea.vmem [#allocation2], 48
    %v124 = vld [vmem:[%s123] sm:%s89]
    %s125 = sshllo.u32 0, 1
    %s126 = smul.addr 1, 6
    %s127 = scalar_lea.vmem [#allocation0], %s126
    %128 = vst [vmem:[%s127] sm:%s125] %v124
    %s129 = scalar_lea.vmem [#allocation2], 56
    %v130 = vld [vmem:[%s129] sm:%s89]
    %s131 = sshllo.u32 0, 1
    %s132 = smul.addr 1, 7
    %s133 = scalar_lea.vmem [#allocation0], %s132
    %134 = vst [vmem:[%s133] sm:%s131] %v130
    %s135 = scalar_lea.vmem [#allocation2], 64
    %v136 = vld [vmem:[%s135] sm:%s89]
    %s137 = sshllo.u32 0, 1
    %s138 = smul.addr 1, 8
    %s139 = scalar_lea.vmem [#allocation0], %s138
    %140 = vst [vmem:[%s139] sm:%s137] %v136
    %s141 = scalar_lea.vmem [#allocation2], 72
    %v142 = vld [vmem:[%s141] sm:%s89]
    %s143 = sshllo.u32 0, 1
    %s144 = smul.addr 1, 9
    %s145 = scalar_lea.vmem [#allocation0], %s144
    %146 = vst [vmem:[%s145] sm:%s143] %v142
    %s147 = scalar_lea.vmem [#allocation2], 80
    %v148 = vld [vmem:[%s147] sm:%s89]
    %s149 = sshllo.u32 0, 1
    %s150 = smul.addr 1, 10
    %s151 = scalar_lea.vmem [#allocation0], %s150
    %152 = vst [vmem:[%s151] sm:%s149] %v148
    %s153 = scalar_lea.vmem [#allocation2], 88
    %v154 = vld [vmem:[%s153] sm:%s89]
    %s155 = sshllo.u32 0, 1
    %s156 = smul.addr 1, 11
    %s157 = scalar_lea.vmem [#allocation0], %s156
    %158 = vst [vmem:[%s157] sm:%s155] %v154
    %s159 = scalar_lea.vmem [#allocation2], 96
    %v160 = vld [vmem:[%s159] sm:%s89]
    %s161 = sshllo.u32 0, 1
    %s162 = smul.addr 1, 12
    %s163 = scalar_lea.vmem [#allocation0], %s162
    %164 = vst [vmem:[%s163] sm:%s161] %v160
    %s165 = scalar_lea.vmem [#allocation2], 104
    %v166 = vld [vmem:[%s165] sm:%s89]
    %s167 = sshllo.u32 0, 1
    %s168 = smul.addr 1, 13
    %s169 = scalar_lea.vmem [#allocation0], %s168
    %170 = vst [vmem:[%s169] sm:%s167] %v166
    %s172 = ssub.s32 224, 224
    %173 = vsyncadd [#allocation1], %s172
    %s175 = sshll.u32 [#allocation0], 4
    %s176 = int_to_ptr.vmem [resolvable:$true] %s175
    %178 = dma.vmem_to_hbm [thread:$0]  %s176, 224, %s1, [#allocation1]
    %179 = dma.done [#allocation1], 224
    %180 = vsyncpa [#allocation1], 1

// kernel: cnn_forward.1
$region0: #{cnn_forward.1}
  #allocation0 [shape = 'u32[]', space=smem, size = 0x4, offset = 0x4, fixed_abs, tag = 'smem constant byte address 0x4 - core index']
  #allocation1 [shape = 'u32[144,128]{1,0:T(1,128)}', space=vmem, size = 0x12000, scoped, tag = 'internal scratch']
  #allocation2 [shape = 'f32[8,1]{1,0:T(8,128)}', space=vmem, size = 0x1000, scoped, tag = 'scratch operand']
  #allocation3 [shape = 'f32[8,1]{1,0:T(8,128)}', space=vmem, size = 0x1000, scoped, tag = 'scratch operand']
  #allocation4 [shape = 'f32[8,1]{1,0:T(8,128)}', space=vmem, size = 0x1000, scoped, tag = 'scratch operand']
  #allocation5 [shape = 'f32[8,1]{1,0:T(8,128)}', space=vmem, size = 0x1000, scoped, tag = 'scratch operand']
  #allocation6 [shape = 'f32[1,1]{1,0:T(1,128)S(1)}', space=vmem, size = 0x200, scoped, tag = 'scoped memory for cnn_forward.1']
  %s0 = inlined_call_operand.vmem [shape: bf16[64,128], index: 0, kind: input, shape index: {}]
  %s1 = inlined_call_operand.vmem [shape: bf16[32,64], index: 1, kind: input, shape index: {}]
  %s2 = inlined_call_operand.vmem [shape: f32[8,1], index: 2, kind: input, shape index: {}]
  %s3 = inlined_call_operand.vmem [shape: f32[8,1], index: 3, kind: input, shape index: {}]
  %s4 = inlined_call_operand.vmem [shape: f32[8,1], index: 4, kind: input, shape index: {}]
  %s5 = inlined_call_operand.<no memory space> [shape: f32[1,1], index: 5, kind: input, shape index: {}]
  %s6 = inlined_call_operand.vmem [shape: f32[1,128], index: 6, kind: output, shape index: {}]
  %s7 = sld [smem:[#allocation0]]
  $region73: #{cnn_forward.1} parent=0
    _
  %s9 = ssub.s32 1, %s7
  %s10 = scalar_select 0, %s9, %s7
  %v11 = vstv %s5
  %12 = vst [vmem:[#allocation6] sm:$0x1] %v11
  loop: start=0, step=1, limit=4
  $region2: #{cnn_forward.1} parent=0 // loop_pre_header
    _
  $region3: #{cnn_forward.1} parent=0 // loop_header
    %s14 = sphi 0, %s18
    %p15 = scmp.ge.s32.totalorder %s14, 4
    %s21 = sphi 0, %s33
    %s22 = sphi 0, %s29
    %s23 = sphi 0, %s21
    %s24 = sphi 0, %s22
    %s25 = sphi 0, %s23
    %s26 = sphi 0, %s24
    %s36 = sphi 0, %s38
    %s39 = sphi 0, %s36
    %s40 = sphi 0, %s39
    %s56 = sphi 0, %s40
    %s60 = sphi 0, %s60
    %s62 = sphi 0, %s60
    %s63 = sphi 0, %s62
    %s77 = sphi 0, %s63
    %s81 = sphi 0, %s81
    %s83 = sphi 0, %s81
    %s84 = sphi 0, %s83
    %s98 = sphi 0, %s84
    %s102 = sphi 0, %s102
    %s104 = sphi 0, %s102
    %s105 = sphi 0, %s104
    %s119 = sphi 0, %s105
    %s123 = sphi 0, %s123
    %s125 = sphi 0, %s123
    %s126 = sphi 0, %s125
    %s140 = sphi 0, %s126
    %s144 = sphi 0, %s144
    %s146 = sphi 0, %s144
    %s147 = sphi 0, %s146
    %s161 = sphi 0, %s147
    %s169 = sphi 0, %s171
    %s172 = sphi 0, %s169
    %s173 = sphi 0, %s172
    %s189 = sphi 0, %s173
  $region4: #{cnn_forward.1} parent=0 // loop_header_branch
    %17 = sbr.rel (%p15) target = $region8
  $region5: #{cnn_forward.1} parent=0 // loop_body
    %s19 = ssub.s32 %s14, 1
    %s20 = ssub.s32 %s14, 2
    %s27 = sadd.s32 1, %s22
    %p28 = scmp.ge.s32.totalorder %s27, 1
    %s29 = scalar_select %p28, 0, %s27
    %s30 = sadd.s32 1, %s21
    %s31 = scalar_select %p28, %s30, %s21
    %p32 = scmp.ge.s32.totalorder %s31, 2
    %s33 = scalar_select %p32, 0, %s31
    %s34 = ssub.s32 %s22, %s29
    %p35 = scmp.eq.s32.totalorder %s34, 0
    %s37 = sadd.s32 %s36, 1
    %s38 = scalar_select %p35, %s36, %s37
    %p41 = pneg %p35
    %p42 = scmp.eq.s32.totalorder %s14, 1
    %p43 = por %p41, %p42
    %p44 = scmp.ne.s32.totalorder %s36, %s39
    %p45 = scmp.eq.s32.totalorder %s14, 0
    %p46 = por %p44, %p45
    %p47 = scmp.ne.s32.totalorder %s36, %s39
    %p48 = scmp.eq.s32.totalorder %s19, 1
    %p49 = por %p47, %p48
    %p50 = scmp.ne.s32.totalorder %s39, %s40
    %p51 = scmp.eq.s32.totalorder %s19, 0
    %p52 = por %p50, %p51
    %p53 = scmp.ne.s32.totalorder %s39, %s40
    %p54 = scmp.eq.s32.totalorder %s20, 1
    %p55 = por %p53, %p54
    %p57 = scmp.ne.s32.totalorder %s40, %s56
    %p58 = scmp.eq.s32.totalorder %s20, 0
    %p59 = por %p57, %p58
    %s61 = sadd.s32 %s60, 1
    %p64 = scmp.eq.s32.totalorder %s14, 1
    %p65 = scmp.ne.s32.totalorder %s60, %s62
    %p66 = scmp.eq.s32.totalorder %s14, 0
    %p67 = por %p65, %p66
    %p68 = scmp.ne.s32.totalorder %s60, %s62
    %p69 = scmp.eq.s32.totalorder %s19, 1
    %p70 = por %p68, %p69
    %p71 = scmp.ne.s32.totalorder %s62, %s63
    %p72 = scmp.eq.s32.totalorder %s19, 0
    %p73 = por %p71, %p72
    %p74 = scmp.ne.s32.totalorder %s62, %s63
    %p75 = scmp.eq.s32.totalorder %s20, 1
    %p76 = por %p74, %p75
    %p78 = scmp.ne.s32.totalorder %s63, %s77
    %p79 = scmp.eq.s32.totalorder %s20, 0
    %p80 = por %p78, %p79
    %s82 = sadd.s32 %s81, 1
    %p85 = scmp.eq.s32.totalorder %s14, 1
    %p86 = scmp.ne.s32.totalorder %s81, %s83
    %p87 = scmp.eq.s32.totalorder %s14, 0
    %p88 = por %p86, %p87
    %p89 = scmp.ne.s32.totalorder %s81, %s83
    %p90 = scmp.eq.s32.totalorder %s19, 1
    %p91 = por %p89, %p90
    %p92 = scmp.ne.s32.totalorder %s83, %s84
    %p93 = scmp.eq.s32.totalorder %s19, 0
    %p94 = por %p92, %p93
    %p95 = scmp.ne.s32.totalorder %s83, %s84
    %p96 = scmp.eq.s32.totalorder %s20, 1
    %p97 = por %p95, %p96
    %p99 = scmp.ne.s32.totalorder %s84, %s98
    %p100 = scmp.eq.s32.totalorder %s20, 0
    %p101 = por %p99, %p100
    %s103 = sadd.s32 %s102, 1
    %p106 = scmp.eq.s32.totalorder %s14, 1
    %p107 = scmp.ne.s32.totalorder %s102, %s104
    %p108 = scmp.eq.s32.totalorder %s14, 0
    %p109 = por %p107, %p108
    %p110 = scmp.ne.s32.totalorder %s102, %s104
    %p111 = scmp.eq.s32.totalorder %s19, 1
    %p112 = por %p110, %p111
    %p113 = scmp.ne.s32.totalorder %s104, %s105
    %p114 = scmp.eq.s32.totalorder %s19, 0
    %p115 = por %p113, %p114
    %p116 = scmp.ne.s32.totalorder %s104, %s105
    %p117 = scmp.eq.s32.totalorder %s20, 1
    %p118 = por %p116, %p117
    %p120 = scmp.ne.s32.totalorder %s105, %s119
    %p121 = scmp.eq.s32.totalorder %s20, 0
    %p122 = por %p120, %p121
    %s124 = sadd.s32 %s123, 1
    %p127 = scmp.eq.s32.totalorder %s14, 1
    %p128 = scmp.ne.s32.totalorder %s123, %s125
    %p129 = scmp.eq.s32.totalorder %s14, 0
    %p130 = por %p128, %p129
    %p131 = scmp.ne.s32.totalorder %s123, %s125
    %p132 = scmp.eq.s32.totalorder %s19, 1
    %p133 = por %p131, %p132
    %p134 = scmp.ne.s32.totalorder %s125, %s126
    %p135 = scmp.eq.s32.totalorder %s19, 0
    %p136 = por %p134, %p135
    %p137 = scmp.ne.s32.totalorder %s125, %s126
    %p138 = scmp.eq.s32.totalorder %s20, 1
    %p139 = por %p137, %p138
    %p141 = scmp.ne.s32.totalorder %s126, %s140
    %p142 = scmp.eq.s32.totalorder %s20, 0
    %p143 = por %p141, %p142
    %s145 = sadd.s32 %s144, 1
    %p148 = scmp.eq.s32.totalorder %s14, 1
    %p149 = scmp.ne.s32.totalorder %s144, %s146
    %p150 = scmp.eq.s32.totalorder %s14, 0
    %p151 = por %p149, %p150
    %p152 = scmp.ne.s32.totalorder %s144, %s146
    %p153 = scmp.eq.s32.totalorder %s19, 1
    %p154 = por %p152, %p153
    %p155 = scmp.ne.s32.totalorder %s146, %s147
    %p156 = scmp.eq.s32.totalorder %s19, 0
    %p157 = por %p155, %p156
    %p158 = scmp.ne.s32.totalorder %s146, %s147
    %p159 = scmp.eq.s32.totalorder %s20, 1
    %p160 = por %p158, %p159
    %p162 = scmp.ne.s32.totalorder %s147, %s161
    %p163 = scmp.eq.s32.totalorder %s20, 0
    %p164 = por %p162, %p163
    %s165 = smul.u32 %s21, %s22
    %s166 = smul.u32 %s33, %s29
    %s167 = ssub.s32 %s165, %s166
    %p168 = scmp.eq.s32.totalorder %s167, 0
    %s170 = sadd.s32 %s169, 1
    %s171 = scalar_select %p168, %s169, %s170
    %p174 = pneg %p168
    %p175 = scmp.eq.s32.totalorder %s14, 1
    %p176 = por %p174, %p175
    %p177 = scmp.ne.s32.totalorder %s169, %s172
    %p178 = scmp.eq.s32.totalorder %s14, 0
    %p179 = por %p177, %p178
    %p180 = scmp.ne.s32.totalorder %s169, %s172
    %p181 = scmp.eq.s32.totalorder %s19, 1
    %p182 = por %p180, %p181
    %p183 = scmp.ne.s32.totalorder %s172, %s173
    %p184 = scmp.eq.s32.totalorder %s19, 0
    %p185 = por %p183, %p184
    %p186 = scmp.ne.s32.totalorder %s172, %s173
    %p187 = scmp.eq.s32.totalorder %s20, 1
    %p188 = por %p186, %p187
    %p190 = scmp.ne.s32.totalorder %s173, %s189
    %p191 = scmp.eq.s32.totalorder %s20, 0
    %p192 = por %p190, %p191
    %p193 = scmp.le.s32.totalorder 1, %s14
    %p194 = scmp.lt.s32.totalorder %s14, 3
    %p195 = pnand %p193, %p194
    %p196 = pneg %p195
    // Predicated region
    $region9: #{cnn_forward.1} parent=5 // pred_check
      _
    $region10: #{cnn_forward.1} parent=5 // pred_check_branch
      %198 = sbr.rel (%p195) target = $region12
    $region11: #{cnn_forward.1} parent=5 // pred_region
      %s199 = ssub.s32 %s14, 1
      // Predicated region
      $region13: #{cnn_forward.1} parent=11 // pred_check
        %p200 = pneg %p52
      $region14: #{cnn_forward.1} parent=11 // pred_check_branch
        %202 = sbr.rel (%p200) target = $region16
      $region15: #{cnn_forward.1} parent=11 // pred_region
        %p203 = scmp.lt.s32.totalorder %s24, 0
        %s204 = scalar_select %p203, %s24, 0
        %s205 = smul.addr %s204, 4
        %s206 = scalar_lea.vmem %s0, %s205
      $region16: #{cnn_forward.1} parent=11 // pred_fallthru
        _
      // Predicated region
      $region17: #{cnn_forward.1} parent=11 // pred_check
        %p207 = pneg %p73
      $region18: #{cnn_forward.1} parent=11 // pred_check_branch
        %209 = sbr.rel (%p207) target = $region20
      $region19: #{cnn_forward.1} parent=11 // pred_region
        _
      $region20: #{cnn_forward.1} parent=11 // pred_fallthru
        _
      // Predicated region
      $region21: #{cnn_forward.1} parent=11 // pred_check
        %p210 = pneg %p94
      $region22: #{cnn_forward.1} parent=11 // pred_check_branch
        %212 = sbr.rel (%p210) target = $region24
      $region23: #{cnn_forward.1} parent=11 // pred_region
        _
      $region24: #{cnn_forward.1} parent=11 // pred_fallthru
        _
      // Predicated region
      $region25: #{cnn_forward.1} parent=11 // pred_check
        %p213 = pneg %p115
      $region26: #{cnn_forward.1} parent=11 // pred_check_branch
        %215 = sbr.rel (%p213) target = $region28
      $region27: #{cnn_forward.1} parent=11 // pred_region
        _
      $region28: #{cnn_forward.1} parent=11 // pred_fallthru
        _
      // Predicated region
      $region29: #{cnn_forward.1} parent=11 // pred_check
        %p216 = pneg %p136
      $region30: #{cnn_forward.1} parent=11 // pred_check_branch
        %218 = sbr.rel (%p216) target = $region32
      $region31: #{cnn_forward.1} parent=11 // pred_region
        _
      $region32: #{cnn_forward.1} parent=11 // pred_fallthru
        _
      // Predicated region
      $region33: #{cnn_forward.1} parent=11 // pred_check
        %p219 = pneg %p157
      $region34: #{cnn_forward.1} parent=11 // pred_check_branch
        %221 = sbr.rel (%p219) target = $region36
      $region35: #{cnn_forward.1} parent=11 // pred_region
        _
      $region36: #{cnn_forward.1} parent=11 // pred_fallthru
        _
    $region12: #{cnn_forward.1} parent=5 // pred_fallthru
      _
    %p222 = scmp.lt.s32.totalorder %s14, 2
    // Predicated region
    $region37: #{cnn_forward.1} parent=5 // pred_check
      %p223 = pneg %p222
    $region38: #{cnn_forward.1} parent=5 // pred_check_branch
      %225 = sbr.rel (%p223) target = $region40
    $region39: #{cnn_forward.1} parent=5 // pred_region
      _
    $region40: #{cnn_forward.1} parent=5 // pred_fallthru
      _
    %p226 = scmp.le.s32.totalorder 1, %s14
    %p227 = scmp.lt.s32.totalorder %s14, 3
    %p228 = pnand %p226, %p227
    %p229 = pneg %p228
    // Predicated region
    $region41: #{cnn_forward.1} parent=5 // pred_check
      _
    $region42: #{cnn_forward.1} parent=5 // pred_check_branch
      %231 = sbr.rel (%p228) target = $region44
    $region43: #{cnn_forward.1} parent=5 // pred_region
      %s232 = ssub.s32 %s14, 1
      %p233 = scmp.lt.s32.totalorder %s24, 0
      %s234 = scalar_select %p233, %s24, 0
      %s235 = smul.addr %s234, 4
      %s236 = scalar_lea.vmem %s0, %s235
      %p237 = pneg %p52
      %p238 = pneg %p49
      %p239 = pneg %p73
      %p240 = pneg %p70
      %p241 = pneg %p94
      %p242 = pneg %p91
      %p243 = pneg %p115
      %p244 = pneg %p112
      %p245 = pneg %p136
      %p246 = pneg %p133
      %p247 = pneg %p157
      %p248 = pneg %p154
      %p249 = pneg %p185
      %p250 = pneg %p182
      %s251 = smul.u32 %s23, %s24
      %p252 = scmp.lt.s32.totalorder %s251, 0
      %s253 = scalar_select %p252, %s251, 0
      %s254 = scalar_lea.vmem %s6, %s253
      %p255 = scmp.lt.s32.totalorder %s24, 0
      %s256 = scalar_select %p255, %s24, 0
      %s257 = smul.addr %s256, 4
      %s258 = scalar_lea.vmem %s0, %s257
      %s259 = smul.u32 %s23, %s24
      %p260 = scmp.lt.s32.totalorder %s259, 0
      %s261 = scalar_select %p260, %s259, 0
      %s262 = scalar_lea.vmem %s6, %s261
      %s263 = smul.u32 %s23, %s24
      %p265 = scmp.eq.s32.totalorder %s23, 0
      %p266 = scmp.eq.s32.totalorder %s24, 0
      %p267 = pnand %p265, %p266
      %p268 = pneg %p267
      // Predicated region
      $region45: #{cnn_forward.1} parent=43 // pred_check
        _
      $region46: #{cnn_forward.1} parent=43 // pred_check_branch
        %270 = sbr.rel (%p267) target = $region48
      $region47: #{cnn_forward.1} parent=43 // pred_region
        %vm271 = vcmask 7168
        %272 = vst.msk [vmem:[#allocation2] sm:$0xff] %vm271, 0.0
        %273 = vst.msk [vmem:[#allocation3] sm:$0xff] %vm271, 0.0
      $region48: #{cnn_forward.1} parent=43 // pred_fallthru
        _
      %v274 = vld [vmem:[%s1] sm:$0xf]
      %v275 = vld [vmem:[%s1 + $0x4] sm:$0xf]
      %v276 = vld [vmem:[%s1 + $0x8] sm:$0xf]
      %v277 = vld [vmem:[%s1 + $0xc] sm:$0xf]
      %v278 = vld [vmem:[%s258] sm:$0xf]
      %v279 = vld [vmem:[%s258 + $0x4] sm:$0xf]
      %v280 = vld [vmem:[%s258 + $0x8] sm:$0xf]
      %v281 = vld [vmem:[%s258 + $0xc] sm:$0xf]
      %v282 = vld [vmem:[%s258 + $0x10] sm:$0xf]
      %v283 = vld [vmem:[%s258 + $0x14] sm:$0xf]
      %v284 = vld [vmem:[%s258 + $0x18] sm:$0xf]
      %v285 = vld [vmem:[%s258 + $0x1c] sm:$0xf]
      %v290 = vunpack.c.l.b16 %v274
      %v291 = vunpack.c.l.b16 %v275
      %v292 = vunpack.c.l.b16 %v276
      %v293 = vunpack.c.l.b16 %v277
      %v294 = vpack.c.b16 %v291, %v290
      %v295 = vpack.c.b16 %v293, %v292
      %v304 = vunpack.c.l.b16 %v278
      %v305 = vunpack.c.l.b16 %v279
      %v306 = vunpack.c.l.b16 %v280
      %v307 = vunpack.c.l.b16 %v281
      %v308 = vunpack.c.l.b16 %v282
      %v309 = vunpack.c.l.b16 %v283
      %v310 = vunpack.c.l.b16 %v284
      %v311 = vunpack.c.l.b16 %v285
      %v312 = vpack.c.b16 %v305, %v304
      %v313 = vpack.c.b16 %v307, %v306
      %v314 = vpack.c.b16 %v309, %v308
      %v315 = vpack.c.b16 %v311, %v310
      %vm320 = vcmask 523264
      %v322 = vsel %vm320, %v294, 0
      %v325 = vsel %vm320, %v295, 0
      %327 = vmatprep.subr.bf16.mxu0 0
      %328 = vmatpush1.bf16.msra.mxu0 %v312
      %329 = vmatprep.subr.bf16.mxu0 0
      %330 = vmatpush1.bf16.msra.mxu0 %v313
      %331 = vmatprep.subr.bf16.mxu0 0
      %332 = vmatpush1.bf16.msra.mxu0 %v314
      %333 = vmatprep.subr.bf16.mxu0 0
      %334 = vmatpush1.bf16.msra.mxu0 %v315
      %335 = vmatprep.subr.bf16.mxu0 0
      %336 = vmatpush1.bf16.msra.mxu0 0
      %337 = vmatprep.subr.bf16.mxu0 0
      %338 = vmatpush1.bf16.msra.mxu0 0
      %339 = vmatprep.subr.bf16.mxu0 0
      %340 = vmatpush1.bf16.msra.mxu0 0
      %341 = vmatprep.subr.bf16.mxu0 0
      %342 = vmatpush1.bf16.msra.mxu0 0
      %343 = vmatprep.subr.bf16.mxu0 0
      %344 = vmatpush1.bf16.msra.mxu0 0
      %345 = vmatprep.subr.bf16.mxu0 0
      %346 = vmatpush1.bf16.msra.mxu0 0
      %347 = vmatprep.subr.bf16.mxu0 0
      %348 = vmatpush1.bf16.msra.mxu0 0
      %349 = vmatprep.subr.bf16.mxu0 0
      %350 = vmatpush1.bf16.msra.mxu0 0
      %351 = vmatprep.subr.bf16.mxu0 0
      %352 = vmatpush1.bf16.msra.mxu0 0
      %353 = vmatprep.subr.bf16.mxu0 0
      %354 = vmatpush1.bf16.msra.mxu0 0
      %355 = vmatprep.subr.bf16.mxu0 0
      %356 = vmatpush1.bf16.msra.mxu0 0
      %357 = vmatprep.subr.bf16.mxu0 0
      %358 = vmatpush1.bf16.msra.mxu0 0
      %359 = vmatprep.mubr.bf16.mxu0 0
      %360 = vmatmul.mubr.bf16.gmra.mrb[0].mxu0 %v322
      %v361 = vpop.f32.mrb[0].mxu0
      %v362 = vadd.f32 0.0, %v361
      %v363 = vpop.f32.mrb[0].mxu0
      %v364 = vpop.f32.mrb[0].mxu0
      %v365 = vadd.f32 0.0, %v364
      %v366 = vpop.f32.mrb[0].mxu0
      %367 = vmatprep.mubr.bf16.mxu0 0
      %368 = vmatmul.mubr.bf16.gmra.mrb[0].mxu0 %v325
      %v369 = vpop.f32.mrb[0].mxu0
      %v370 = vadd.f32 0.0, %v369
      %v371 = vpop.f32.mrb[0].mxu0
      %v372 = vpop.f32.mrb[0].mxu0
      %v373 = vadd.f32 0.0, %v372
      %v374 = vpop.f32.mrb[0].mxu0
      %375 = vdwg.mxu0
      // Predicated region
      $region49: #{cnn_forward.1} parent=43 // pred_check
        %p376 = pneg %p265
      $region50: #{cnn_forward.1} parent=43 // pred_check_branch
        %378 = sbr.rel (%p376) target = $region52
      $region51: #{cnn_forward.1} parent=43 // pred_region
        %379 = vadd.xlane.f32.xlu0 %v362
        %v380 = vpop.xlane.xlu0 %379
        %381 = vadd.xlane.f32.xlu0 %v365
        %v382 = vpop.xlane.xlu0 %381
        %383 = vadd.xlane.f32.xlu0 %v370
        %v384 = vpop.xlane.xlu0 %383
        %385 = vadd.xlane.f32.xlu0 %v373
        %v386 = vpop.xlane.xlu0 %385
        %v387 = vmul.f32 %v362, %v362
        %v388 = vmul.f32 %v365, %v365
        %v389 = vmul.f32 %v370, %v370
        %v390 = vmul.f32 %v373, %v373
        %391 = vadd.xlane.f32.xlu0 %v387
        %v392 = vpop.xlane.xlu0 %391
        %393 = vadd.xlane.f32.xlu0 %v388
        %v394 = vpop.xlane.xlu0 %393
        %395 = vadd.xlane.f32.xlu0 %v389
        %v396 = vpop.xlane.xlu0 %395
        %397 = vadd.xlane.f32.xlu0 %v390
        %v398 = vpop.xlane.xlu0 %397
        %v399 = vadd.f32 %v380, %v382
        %v400 = vadd.f32 %v392, %v394
        %v401 = vadd.f32 %v399, %v384
        %v402 = vadd.f32 %v400, %v396
        %v403 = vadd.f32 %v401, %v386
        %v404 = vadd.f32 %v402, %v398
        %v405 = vld [vmem:[#allocation2] sm:$0xff]
        %v406 = vadd.f32 %v405, %v403
        %vm407 = vcmask 7168
        %408 = vst.msk [vmem:[#allocation2] sm:$0xff] %vm407, %v406
        %v409 = vld [vmem:[#allocation3] sm:$0xff]
        %v410 = vadd.f32 %v409, %v404
        %411 = vst.msk [vmem:[#allocation3] sm:$0xff] %vm407, %v410
      $region52: #{cnn_forward.1} parent=43 // pred_fallthru
        _
      // Predicated region
      $region53: #{cnn_forward.1} parent=43 // pred_check
        _
      $region54: #{cnn_forward.1} parent=43 // pred_check_branch
        %413 = sbr.rel (%p267) target = $region56
      $region55: #{cnn_forward.1} parent=43 // pred_region
        %v414 = vld [vmem:[#allocation2] sm:$0xff]
        %v415 = vmul.f32 %v414, 0.0025510204
        %v416 = vld [vmem:[#allocation3] sm:$0xff]
        %v417 = vmul.f32 %v416, 0.0025510204
        %v418 = vmul.f32 %v415, %v415
        %v419 = vsub.f32 %v417, %v418
        %v420 = vld [vmem:[%s2] sm:$0xff]
        %v421 = vadd.f32 %v419, 1e-05
        %v422 = vrsqrt.pop %v421
        %v423 = vmul.f32 %v420, %v422
        %vm424 = vcmask 7168
        %425 = vst.msk [vmem:[#allocation4] sm:$0xff] %vm424, %v423
        %v426 = vld [vmem:[%s3] sm:$0xff]
        %v427 = vmul.f32 %v415, %v423
        %v428 = vsub.f32 %v426, %v427
        %429 = vst.msk [vmem:[#allocation5] sm:$0xff] %vm424, %v428
      $region56: #{cnn_forward.1} parent=43 // pred_fallthru
        _
      %p430 = scmp.eq.s32.totalorder %s23, 1
      // Predicated region
      $region57: #{cnn_forward.1} parent=43 // pred_check
        %p431 = pneg %p430
      $region58: #{cnn_forward.1} parent=43 // pred_check_branch
        %433 = sbr.rel (%p431) target = $region60
      $region59: #{cnn_forward.1} parent=43 // pred_region
        %v434 = vld [vmem:[#allocation4] sm:$0xff]
        %v435 = vld [vmem:[#allocation5] sm:$0xff]
        %437 = vset.pattern.permute.xlu0 0
        %438 = vperm.xlu0 %437, %v434
        %v439 = vpop.permute.xlu0 %438
        %v441 = vmul.f32 %v362, %v439
        %443 = vset.pattern.permute.xlu0 0
        %444 = vperm.xlu0 %443, %v435
        %v445 = vpop.permute.xlu0 %444
        %v447 = vadd.f32 %v441, %v445
        %v448 = vmul.f32 %v365, %v439
        %v449 = vadd.f32 %v448, %v445
        %v450 = vmax.f32 %v447, %v449
        %v451 = vmul.f32 %v370, %v439
        %v452 = vadd.f32 %v451, %v445
        %v453 = vmax.f32 %v450, %v452
        %v454 = vmul.f32 %v373, %v439
        %v455 = vadd.f32 %v454, %v445
        %v456 = vmax.f32 %v453, %v455
        %vm457 = vcmp.gt.f32.partialorder %v456, 0.0
        %v458 = vmin.f32 %v456, 0.0
        %v459 = vmul.f32 %v458, 1.442695
        %v460 = vpow.pop %v459
        %v461 = vsub.f32 %v460, 1.0
        %v462 = vsel %vm457, %v456, %v461
        %v463 = vld [vmem:[%s4] sm:$0xff]
        %465 = vset.pattern.permute.xlu0 0
        %466 = vperm.xlu0 %465, %v463
        %v467 = vpop.permute.xlu0 %466
        %v469 = vmul.f32 %v462, %v467
        %v470 = vrot.slane %v469, 4
        %v471 = vadd.f32 %v469, %v470
        %v472 = vrot.slane %v471, 2
        %v473 = vadd.f32 %v471, %v472
        %v474 = vrot.slane %v473, 1
        %v475 = vadd.f32 %v473, %v474
        %v476 = vld [vmem:[#allocation6] sm:$0x1]
        %478 = vset.pattern.permute.xlu0 0
        %479 = vperm.xlu0 %478, %v476
        %v480 = vpop.permute.xlu0 %479
        %v482 = vlaneseq
        %v483 = vshrl.u32 %v482, 7
        %v484 = vsub.s32 0, %v483
        %v485 = vrot.slane %v480, %v484
        %v486 = vadd.f32 %v475, %v485
        %vm487 = vcmp.gt.f32.partialorder %v486, 0.0
        %v488 = vmin.f32 %v486, 0.0
        %v489 = vmul.f32 %v488, 1.442695
        %v490 = vpow.pop %v489
        %v491 = vsub.f32 %v490, 1.0
        %v492 = vsel %vm487, %v486, %v491
        %493 = vst [vmem:[%s262] sm:$0x1] %v492
      $region60: #{cnn_forward.1} parent=43 // pred_fallthru
        _
      %s494 = smul.u32 %s23, %s24
      %p495 = scmp.lt.s32.totalorder %s494, 0
      %s496 = scalar_select %p495, %s494, 0
      %s497 = scalar_lea.vmem %s6, %s496
      // Predicated region
      $region61: #{cnn_forward.1} parent=43 // pred_check
        %p498 = pneg %p182
      $region62: #{cnn_forward.1} parent=43 // pred_check_branch
        %500 = sbr.rel (%p498) target = $region64
      $region63: #{cnn_forward.1} parent=43 // pred_region
        %s501 = smul.u32 %s23, %s24
      $region64: #{cnn_forward.1} parent=43 // pred_fallthru
        _
    $region44: #{cnn_forward.1} parent=5 // pred_fallthru
      _
    %p502 = scmp.le.s32.totalorder 2, %s14
    // Predicated region
    $region65: #{cnn_forward.1} parent=5 // pred_check
      %p503 = pneg %p502
    $region66: #{cnn_forward.1} parent=5 // pred_check_branch
      %505 = sbr.rel (%p503) target = $region68
    $region67: #{cnn_forward.1} parent=5 // pred_region
      %s506 = ssub.s32 %s14, 2
      // Predicated region
      $region69: #{cnn_forward.1} parent=67 // pred_check
        %p507 = pneg %p188
      $region70: #{cnn_forward.1} parent=67 // pred_check_branch
        %509 = sbr.rel (%p507) target = $region72
      $region71: #{cnn_forward.1} parent=67 // pred_region
        %s510 = smul.u32 %s25, %s26
        %p511 = scmp.lt.s32.totalorder %s510, 0
        %s512 = scalar_select %p511, %s510, 0
        %s513 = scalar_lea.vmem %s6, %s512
      $region72: #{cnn_forward.1} parent=67 // pred_fallthru
        _
    $region68: #{cnn_forward.1} parent=5 // pred_fallthru
      _
  $region6: #{cnn_forward.1} parent=0 // loop_footer
    %s18 = sadd.s32 1, %s14
  $region7: #{cnn_forward.1} parent=0 // loop_footer_branch
    %13 = sbr.rel target = $region3
  $region8: #{cnn_forward.1} parent=0 // loop_exit
    _

</llo_original>
